<compile_context>
chip_gen: v7x
topology: tpu7x:2x2x1
jax: 0.10.0
libtpu: 0.0.40
codegen_flags: <defaults>
</compile_context>

<pallas_src>
import functools

import jax
import jax.numpy as jnp
from jax.experimental import pallas as pl
from jax.experimental.pallas import tpu as pltpu

P_NEG = 1.0          # module hardcodes self._p_neg = 1
FUNCTION = "rect"    # TODO(synk): param.function comes from an external config
                     #             module; default to the non-sigmoid branch.
                     #             Set FUNCTION = "logi" for the sigmoid path.
SPLIT = 2            # outer "parallel" grid axis (uses both TCs on v7x;
                     # harmless sequential split on 1-TC v5e/v6e)

# coefficient columns in the [rows, 8] coef slab
_COL_W, _COL_C, _COL_REG, _COL_LW, _COL_LB = 0, 1, 2, 3, 4


# ----------------------------- Pallas kernel -------------------------------
def ud_loss_kernel(slab_ref, coef_ref, out_ref, acc_ref):
    """One row-tile of the UD loss.

    slab_ref : [6, TR, D]  fields (e_h, m_h, e_t, m_t, e_r, m_r)
    coef_ref : [TR, 8]     per-row (w, loss_coef, reg_coef, lin_w, lin_b, 0,0,0)
    out_ref  : [1, 8, 128] per-split partial loss (broadcast scalar)
    acc_ref  : [TR, 1]     VMEM accumulator of per-row loss terms
    """
    i = pl.program_id(1)

    @pl.when(i == 0)
    def _init():
        acc_ref[...] = jnp.zeros_like(acc_ref)

    e_h = slab_ref[0]
    m_h = slab_ref[1]
    e_t = slab_ref[2]
    m_t = slab_ref[3]
    e_r = slab_ref[4]
    m_r = slab_ref[5]

    coef = coef_ref[...]
    w_row = coef[:, _COL_W:_COL_W + 1]        # [TR, 1]
    c_row = coef[:, _COL_C:_COL_C + 1]
    reg_row = coef[:, _COL_REG:_COL_REG + 1]
    lw = coef[:, _COL_LW:_COL_LW + 1]
    lb = coef[:, _COL_LB:_COL_LB + 1]

    # TransD-style projection: e + <e, m> * m_r
    head = e_h + jnp.sum(e_h * m_h, axis=-1, keepdims=True) * m_r
    tail = e_t + jnp.sum(e_t * m_t, axis=-1, keepdims=True) * m_r

    # DistMult-style score -> Linear(1, 1)
    score = jnp.sum(head * tail * e_r, axis=-1, keepdims=True)    # [TR, 1]
    f = lw * score + lb
    if FUNCTION == "logi":
        f = jax.nn.sigmoid(f)

    diff = f - w_row
    # single fused cross-lane reduce for the regularizer (positives only;
    # reg_row is zero for negative / padding rows)
    reg_sq = jnp.sum(head * head + tail * tail + e_r * e_r,
                     axis=-1, keepdims=True)                       # [TR, 1]

    acc_ref[...] += c_row * diff * diff + reg_row * reg_sq

    @pl.when(i == pl.num_programs(1) - 1)
    def _finalize():
        total = jnp.sum(acc_ref[...])
        out_ref[...] = jnp.full(out_ref.shape, total, dtype=out_ref.dtype)


# ------------------------------- wrapper ------------------------------------
def _choose_row_tile(rows, dim, split, vmem_budget_bytes=12 * 1024 * 1024):
    """Row tile (multiple of 8) whose double-buffered blocks fit the budget."""
    bytes_per_row = (6 * dim + 8) * 4 * 2      # slab + coef, double-buffered
    tr = vmem_budget_bytes // bytes_per_row
    per_core = -(-rows // split)               # ceil
    tr = min(tr, -(-per_core // 8) * 8)        # no bigger than one split's share
    tr = max(8, (tr // 8) * 8)
    return int(min(tr, 2048))


def ud_forward(params, h, r, t, w, n_hn, n_rel_hn, n_t, n_h, n_rel_tn, n_tn,
               s_h=None, s_r=None, s_t=None, s_w=None,
               *, dim, batch_size, neg_per_pos, reg_scale):
    """Equivalent of UD.forward (== main_loss); s_* inputs are unused there."""
    del s_h, s_r, s_t, s_w   # forward() only computes main_loss
    ent_emb = params["ent_embedding"]
    rel_emb = params["rel_embedding"]
    ent_map = params["ent_mappings"]
    rel_map = params["rel_mappings"]
    lin_w = params["liner_w"].reshape(()).astype(jnp.float32)
    lin_b = params["liner_b"].reshape(()).astype(jnp.float32)

    B, N, D = batch_size, neg_per_pos, dim
    flat = lambda x: x.reshape(-1)

    # Uniform row stream: [positives(B) ; head-corrupted(B*N) ; tail-corrupted(B*N)]
    head_idx = jnp.concatenate([h, flat(n_hn), flat(n_h)]).astype(jnp.int32)
    rel_idx = jnp.concatenate([r, flat(n_rel_hn), flat(n_rel_tn)]).astype(jnp.int32)
    tail_idx = jnp.concatenate([t, flat(n_t), flat(n_tn)]).astype(jnp.int32)

    rows = B + 2 * B * N
    tr = _choose_row_tile(rows, D, SPLIT)
    steps = -(-rows // (SPLIT * tr))
    rows_pad = SPLIT * tr * steps
    pad = rows_pad - rows

    pad_idx = lambda idx: jnp.pad(idx, (0, pad))
    head_idx, rel_idx, tail_idx = map(pad_idx, (head_idx, rel_idx, tail_idx))

    take = lambda tbl, idx: jnp.take(tbl, idx, axis=0).astype(jnp.float32)
    slab = jnp.stack([take(ent_emb, head_idx), take(ent_map, head_idx),
                      take(ent_emb, tail_idx), take(ent_map, tail_idx),
                      take(rel_emb, rel_idx), take(rel_map, rel_idx)],
                     axis=0)                                     # [6, rows_pad, D]

    n_neg = 2 * B * N
    zeros_pad = jnp.zeros((pad,), jnp.float32)
    w_row = jnp.concatenate([w.astype(jnp.float32),
                             jnp.zeros((n_neg,), jnp.float32), zeros_pad])
    c_row = jnp.concatenate([jnp.full((B,), 1.0 / B, jnp.float32),
                             jnp.full((n_neg,), P_NEG / (2.0 * N * B), jnp.float32),
                             zeros_pad])
    reg_row = jnp.concatenate([jnp.full((B,), reg_scale / (2.0 * B), jnp.float32),
                               jnp.zeros((n_neg,), jnp.float32), zeros_pad])
    lw_col = jnp.full((rows_pad,), lin_w, jnp.float32)
    lb_col = jnp.full((rows_pad,), lin_b, jnp.float32)
    zcol = jnp.zeros((rows_pad,), jnp.float32)
    coef = jnp.stack([w_row, c_row, reg_row, lw_col, lb_col, zcol, zcol, zcol],
                     axis=1)                                     # [rows_pad, 8]

    slab_spec = pl.BlockSpec((6, tr, D), lambda c, i: (0, c * steps + i, 0))
    coef_spec = pl.BlockSpec((tr, 8), lambda c, i: (c * steps + i, 0))
    out_spec = pl.BlockSpec((1, 8, 128), lambda c, i: (c, 0, 0))

    grid_spec = pltpu.PrefetchScalarGridSpec(
        num_scalar_prefetch=0,
        grid=(SPLIT, steps),
        in_specs=[slab_spec, coef_spec],
        out_specs=out_spec,
        scratch_shapes=[pltpu.VMEM((tr, 1), jnp.float32)],
    )

    cost = pl.CostEstimate(
        flops=int(16 * rows_pad * D),
        transcendentals=0,
        bytes_accessed=int(4 * (6 * rows_pad * D + 8 * rows_pad + SPLIT * 8 * 128)),
    )

    out = pl.pallas_call(
        ud_loss_kernel,
        out_shape=jax.ShapeDtypeStruct((SPLIT, 8, 128), jnp.float32),
        grid_spec=grid_spec,
        compiler_params=pltpu.CompilerParams(
            dimension_semantics=("parallel", "arbitrary"),
            vmem_limit_bytes=32 * 1024 * 1024),
        cost_estimate=cost,
    )(slab, coef)

    return jnp.sum(out[:, 0, 0])


# --------------------------- plain-JAX reference ----------------------------
def ud_reference(params, h, r, t, w, n_hn, n_rel_hn, n_t, n_h, n_rel_tn, n_tn,
                 *, batch_size, reg_scale):
    ent_emb = params["ent_embedding"]
    rel_emb = params["rel_embedding"]
    ent_map = params["ent_mappings"]
    rel_map = params["rel_mappings"]
    lin_w = params["liner_w"].reshape(())
    lin_b = params["liner_b"].reshape(())

    proj = lambda e, m, pv: e + jnp.sum(e * m, axis=-1, keepdims=True) * pv

    def embed(hh, rr, tt):
        e_h, e_t, e_r = ent_emb[hh], ent_emb[tt], rel_emb[rr]
        m_h, m_t, m_r = ent_map[hh], ent_map[tt], rel_map[rr]
        return proj(e_h, m_h, m_r), e_r, proj(e_t, m_t, m_r)

    head, rel_, tail = embed(h, r, t)
    hn_h, hn_r, hn_t = embed(n_hn, n_rel_hn, n_t)
    tn_h, tn_r, tn_t = embed(n_h, n_rel_tn, n_tn)

    lin = lambda x: lin_w * x + lin_b
    f_prob_h = lin(jnp.sum(tail * head * rel_, axis=-1))       # [B]
    f_prob_hn = lin(jnp.sum(hn_t * hn_h * hn_r, axis=-1))       # [B, N]
    f_prob_tn = lin(jnp.sum(tn_t * tn_h * tn_r, axis=-1))       # [B, N]
    if FUNCTION == "logi":
        f_prob_h, f_prob_hn, f_prob_tn = map(
            jax.nn.sigmoid, (f_prob_h, f_prob_hn, f_prob_tn))
    f_score_h = (f_prob_h - w) ** 2
    f_score_hn = jnp.mean(f_prob_hn ** 2, axis=1)
    f_score_tn = jnp.mean(f_prob_tn ** 2, axis=1)
    regularizer = (jnp.sum(head ** 2) + jnp.sum(rel_ ** 2)
                   + jnp.sum(tail ** 2)) / 2.0 / batch_size
    this_loss = jnp.sum((f_score_tn + f_score_hn) / 2.0 * P_NEG
                        + f_score_h) / batch_size
    return this_loss + reg_scale * regularizer


# --------------------------------- main --------------------------------------
if __name__ == "__main__":
    num_cons, num_rels = 32, 16
    dim = 128
    batch_size = 8
    neg_per_pos = 4
    reg_scale = 5e-4

    key = jax.random.PRNGKey(0)
    k = jax.random.split(key, 20)

    def xavier(kk, n, d):
        bound = (6.0 / (n + d)) ** 0.5
        return jax.random.uniform(kk, (n, d), jnp.float32, -bound, bound)

    params = {
        "ent_embedding": xavier(k[0], num_cons, dim),
        "rel_embedding": xavier(k[1], num_rels, dim),
        "ent_mappings":  xavier(k[2], num_cons, dim),
        "rel_mappings":  xavier(k[3], num_rels, dim),
        "liner_w": 0.3 * jax.random.normal(k[4], (1, 1), jnp.float32),
        "liner_b": 0.3 * jax.random.normal(k[5], (1,), jnp.float32),
    }

    h = jax.random.randint(k[6], (batch_size,), 0, num_cons)
    r = jax.random.randint(k[7], (batch_size,), 0, num_rels)
    t = jax.random.randint(k[8], (batch_size,), 0, num_cons)
    w = jax.random.uniform(k[9], (batch_size,), jnp.float32)
    n_hn = jax.random.randint(k[10], (batch_size, neg_per_pos), 0, num_cons)
    n_rel_hn = jax.random.randint(k[11], (batch_size, neg_per_pos), 0, num_rels)
    n_t = jax.random.randint(k[12], (batch_size, neg_per_pos), 0, num_cons)
    n_h = jax.random.randint(k[13], (batch_size, neg_per_pos), 0, num_cons)
    n_rel_tn = jax.random.randint(k[14], (batch_size, neg_per_pos), 0, num_rels)
    n_tn = jax.random.randint(k[15], (batch_size, neg_per_pos), 0, num_cons)

    loss_fn = jax.jit(functools.partial(
        ud_forward, dim=dim, batch_size=batch_size,
        neg_per_pos=neg_per_pos, reg_scale=reg_scale))

    loss = loss_fn(params, h, r, t, w, n_hn, n_rel_hn, n_t, n_h, n_rel_tn, n_tn)
    loss = jax.block_until_ready(loss)

    ref = ud_reference(params, h, r, t, w, n_hn, n_rel_hn, n_t, n_h, n_rel_tn,
                       n_tn, batch_size=batch_size, reg_scale=reg_scale)
    ref = jax.block_until_ready(ref)

    assert jnp.allclose(loss, ref, rtol=1e-4, atol=1e-4), (loss, ref)
    print("KERNEL_OK")
</pallas_src>

<mosaic_0001>
module attributes {stable_mosaic.version = 11 : i64} {
  func.func @ud_loss_kernel(%arg0: i32, %arg1: i32, %arg2: memref<6x40x128xf32, #tpu.memory_space<vmem>>, %arg3: memref<40x8xf32, #tpu.memory_space<vmem>>, %arg4: memref<1x8x128xf32, #tpu.memory_space<vmem>>, %arg5: memref<40x1xf32, #tpu.memory_space<vmem>>) attributes {dimension_semantics = [#tpu.dimension_semantics<parallel>, #tpu.dimension_semantics<arbitrary>], iteration_bounds = array<i64: 2, 1>, scalar_prefetch = 0 : i64, scratch_operands = 1 : i64, tpu.core_type = #tpu.core_type<tc>, window_params = [{transform_indices = @transform_0, window_bounds = array<i64: 6, 40, 128>}, {transform_indices = @transform_1, window_bounds = array<i64: 40, 8>}, {transform_indices = @transform_2, window_bounds = array<i64: 1, 8, 128>}]} {
    %c0_i32 = arith.constant 0 : i32
    %0 = arith.cmpi eq, %arg1, %c0_i32 : i32
    %1 = arith.extui %0 : i1 to i32
    %c0_i32_0 = arith.constant 0 : i32
    %2 = arith.cmpi ne, %1, %c0_i32_0 : i32
    scf.if %2 {
      %cst_24 = arith.constant 0.000000e+00 : f32
      %57 = vector.broadcast %cst_24 : f32 to vector<40x1xf32>
      %c0_25 = arith.constant 0 : index
      %c0_26 = arith.constant 0 : index
      %58 = vector.load %arg5[%c0_25, %c0_26] : memref<40x1xf32, #tpu.memory_space<vmem>>, vector<40x1xf32>
      tpu.vector_store %arg5[%c0_25, %c0_26], %57 {strides = array<i32>} : memref<40x1xf32, #tpu.memory_space<vmem>>, vector<40x1xf32>,
    } else {
    }
    %c0 = arith.constant 0 : index
    %c0_1 = arith.constant 0 : index
    %c0_2 = arith.constant 0 : index
    %3 = vector.load %arg2[%c0, %c0_1, %c0_2] : memref<6x40x128xf32, #tpu.memory_space<vmem>>, vector<1x40x128xf32>
    %4 = vector.shape_cast %3 : vector<1x40x128xf32> to vector<40x128xf32>
    %c1 = arith.constant 1 : index
    %c0_3 = arith.constant 0 : index
    %c0_4 = arith.constant 0 : index
    %5 = vector.load %arg2[%c1, %c0_3, %c0_4] : memref<6x40x128xf32, #tpu.memory_space<vmem>>, vector<1x40x128xf32>
    %6 = vector.shape_cast %5 : vector<1x40x128xf32> to vector<40x128xf32>
    %c2 = arith.constant 2 : index
    %c0_5 = arith.constant 0 : index
    %c0_6 = arith.constant 0 : index
    %7 = vector.load %arg2[%c2, %c0_5, %c0_6] : memref<6x40x128xf32, #tpu.memory_space<vmem>>, vector<1x40x128xf32>
    %8 = vector.shape_cast %7 : vector<1x40x128xf32> to vector<40x128xf32>
    %c3 = arith.constant 3 : index
    %c0_7 = arith.constant 0 : index
    %c0_8 = arith.constant 0 : index
    %9 = vector.load %arg2[%c3, %c0_7, %c0_8] : memref<6x40x128xf32, #tpu.memory_space<vmem>>, vector<1x40x128xf32>
    %10 = vector.shape_cast %9 : vector<1x40x128xf32> to vector<40x128xf32>
    %c4 = arith.constant 4 : index
    %c0_9 = arith.constant 0 : index
    %c0_10 = arith.constant 0 : index
    %11 = vector.load %arg2[%c4, %c0_9, %c0_10] : memref<6x40x128xf32, #tpu.memory_space<vmem>>, vector<1x40x128xf32>
    %12 = vector.shape_cast %11 : vector<1x40x128xf32> to vector<40x128xf32>
    %c5 = arith.constant 5 : index
    %c0_11 = arith.constant 0 : index
    %c0_12 = arith.constant 0 : index
    %13 = vector.load %arg2[%c5, %c0_11, %c0_12] : memref<6x40x128xf32, #tpu.memory_space<vmem>>, vector<1x40x128xf32>
    %14 = vector.shape_cast %13 : vector<1x40x128xf32> to vector<40x128xf32>
    %c0_13 = arith.constant 0 : index
    %c0_14 = arith.constant 0 : index
    %15 = vector.load %arg3[%c0_13, %c0_14] : memref<40x8xf32, #tpu.memory_space<vmem>>, vector<40x8xf32>
    %16 = vector.extract_strided_slice %15 {offsets = [0, 0], sizes = [40, 1], strides = [1, 1]} : vector<40x8xf32> to vector<40x1xf32>
    %17 = vector.extract_strided_slice %15 {offsets = [0, 1], sizes = [40, 1], strides = [1, 1]} : vector<40x8xf32> to vector<40x1xf32>
    %18 = vector.extract_strided_slice %15 {offsets = [0, 2], sizes = [40, 1], strides = [1, 1]} : vector<40x8xf32> to vector<40x1xf32>
    %19 = vector.extract_strided_slice %15 {offsets = [0, 3], sizes = [40, 1], strides = [1, 1]} : vector<40x8xf32> to vector<40x1xf32>
    %20 = vector.extract_strided_slice %15 {offsets = [0, 4], sizes = [40, 1], strides = [1, 1]} : vector<40x8xf32> to vector<40x1xf32>
    %21 = arith.mulf %4, %6 : vector<40x128xf32>
    %cst = arith.constant dense<0.000000e+00> : vector<40xf32>
    %22 = vector.multi_reduction <add>, %21, %cst [1] : vector<40x128xf32> to vector<40xf32>
    %23 = vector.shape_cast %22 : vector<40xf32> to vector<40x1xf32>
    %24 = vector.broadcast %23 : vector<40x1xf32> to vector<40x128xf32>
    %25 = arith.mulf %24, %14 : vector<40x128xf32>
    %26 = arith.addf %4, %25 : vector<40x128xf32>
    %27 = arith.mulf %8, %10 : vector<40x128xf32>
    %cst_15 = arith.constant dense<0.000000e+00> : vector<40xf32>
    %28 = vector.multi_reduction <add>, %27, %cst_15 [1] : vector<40x128xf32> to vector<40xf32>
    %29 = vector.shape_cast %28 : vector<40xf32> to vector<40x1xf32>
    %30 = vector.broadcast %29 : vector<40x1xf32> to vector<40x128xf32>
    %31 = arith.mulf %30, %14 : vector<40x128xf32>
    %32 = arith.addf %8, %31 : vector<40x128xf32>
    %33 = arith.mulf %26, %32 : vector<40x128xf32>
    %34 = arith.mulf %33, %12 : vector<40x128xf32>
    %cst_16 = arith.constant dense<0.000000e+00> : vector<40xf32>
    %35 = vector.multi_reduction <add>, %34, %cst_16 [1] : vector<40x128xf32> to vector<40xf32>
    %36 = vector.shape_cast %35 : vector<40xf32> to vector<40x1xf32>
    %37 = arith.mulf %19, %36 : vector<40x1xf32>
    %38 = arith.addf %37, %20 : vector<40x1xf32>
    %39 = arith.subf %38, %16 : vector<40x1xf32>
    %40 = arith.mulf %26, %26 : vector<40x128xf32>
    %41 = arith.mulf %32, %32 : vector<40x128xf32>
    %42 = arith.addf %40, %41 : vector<40x128xf32>
    %43 = arith.mulf %12, %12 : vector<40x128xf32>
    %44 = arith.addf %42, %43 : vector<40x128xf32>
    %cst_17 = arith.constant dense<0.000000e+00> : vector<40xf32>
    %45 = vector.multi_reduction <add>, %44, %cst_17 [1] : vector<40x128xf32> to vector<40xf32>
    %46 = vector.shape_cast %45 : vector<40xf32> to vector<40x1xf32>
    %c0_18 = arith.constant 0 : index
    %c0_19 = arith.constant 0 : index
    %47 = vector.load %arg5[%c0_18, %c0_19] : memref<40x1xf32, #tpu.memory_space<vmem>>, vector<40x1xf32>
    %48 = arith.mulf %17, %39 : vector<40x1xf32>
    %49 = arith.mulf %48, %39 : vector<40x1xf32>
    %50 = arith.mulf %18, %46 : vector<40x1xf32>
    %51 = arith.addf %49, %50 : vector<40x1xf32>
    %52 = arith.addf %47, %51 : vector<40x1xf32>
    %c0_20 = arith.constant 0 : index
    %c0_21 = arith.constant 0 : index
    %53 = vector.load %arg5[%c0_20, %c0_21] : memref<40x1xf32, #tpu.memory_space<vmem>>, vector<40x1xf32>
    tpu.vector_store %arg5[%c0_20, %c0_21], %52 {strides = array<i32>} : memref<40x1xf32, #tpu.memory_space<vmem>>, vector<40x1xf32>,
    %c0_i32_22 = arith.constant 0 : i32
    %54 = arith.cmpi eq, %arg1, %c0_i32_22 : i32
    %55 = arith.extui %54 : i1 to i32
    %c0_i32_23 = arith.constant 0 : i32
    %56 = arith.cmpi ne, %55, %c0_i32_23 : i32
    scf.if %56 {
      %c0_24 = arith.constant 0 : index
      %c0_25 = arith.constant 0 : index
      %57 = vector.load %arg5[%c0_24, %c0_25] : memref<40x1xf32, #tpu.memory_space<vmem>>, vector<40x1xf32>
      %58 = vector.shape_cast %57 : vector<40x1xf32> to vector<1x40x1xf32>
      %cst_26 = arith.constant dense<0.000000e+00> : vector<1xf32>
      %59 = vector.multi_reduction <add>, %58, %cst_26 [1, 2] : vector<1x40x1xf32> to vector<1xf32>
      %60 = vector.shape_cast %59 : vector<1xf32> to vector<1x1x1xf32>
      %61 = vector.extract %60[0, 0, 0] : f32 from vector<1x1x1xf32>
      %62 = vector.broadcast %61 : f32 to vector<1x8x128xf32>
      %c0_27 = arith.constant 0 : index
      %c0_28 = arith.constant 0 : index
      %c0_29 = arith.constant 0 : index
      %63 = vector.load %arg4[%c0_27, %c0_28, %c0_29] : memref<1x8x128xf32, #tpu.memory_space<vmem>>, vector<1x8x128xf32>
      tpu.vector_store %arg4[%c0_27, %c0_28, %c0_29], %62 {strides = array<i32>} : memref<1x8x128xf32, #tpu.memory_space<vmem>>, vector<1x8x128xf32>,
    } else {
    }
    return
  }
  func.func @transform_0(%arg0: i32, %arg1: i32) -> (i32, i32, i32) {
    %c1_i32 = arith.constant 1 : i32
    %0 = arith.muli %arg0, %c1_i32 : i32
    %1 = arith.addi %0, %arg1 : i32
    %c0_i32 = arith.constant 0 : i32
    %c0_i32_0 = arith.constant 0 : i32
    %c0_i32_1 = arith.constant 0 : i32
    return %c0_i32, %1, %c0_i32_0 : i32, i32, i32
  }
  func.func @transform_1(%arg0: i32, %arg1: i32) -> (i32, i32) {
    %c1_i32 = arith.constant 1 : i32
    %0 = arith.muli %arg0, %c1_i32 : i32
    %1 = arith.addi %0, %arg1 : i32
    %c0_i32 = arith.constant 0 : i32
    %c0_i32_0 = arith.constant 0 : i32
    return %1, %c0_i32 : i32, i32
  }
  func.func @transform_2(%arg0: i32, %arg1: i32) -> (i32, i32, i32) {
    %c0_i32 = arith.constant 0 : i32
    %c0_i32_0 = arith.constant 0 : i32
    %c0_i32_1 = arith.constant 0 : i32
    return %arg0, %c0_i32, %c0_i32_0 : i32, i32, i32
  }
}

</mosaic_0001>

<llo_original>
// kernel: ud_forward.1
$region0: #{ud_forward.1}
  #allocation0 [shape = 'u32[]', space=smem, size = 0x4, offset = 0x4, fixed_abs, tag = 'smem constant byte address 0x4 - core index']
  #allocation1 [shape = 'u32[144,128]{1,0:T(1,128)}', space=vmem, size = 0x12000, scoped, tag = 'internal scratch']
  #allocation2 [shape = 'f32[40,1]{1,0:T(8,128)}', space=vmem, size = 0x5000, scoped, tag = 'scratch operand']
  %s0 = inlined_call_operand.vmem [shape: f32[6,80,128], index: 0, kind: input, shape index: {}]
  %s1 = inlined_call_operand.vmem [shape: f32[80,8], index: 1, kind: input, shape index: {}]
  %s2 = inlined_call_operand.vmem [shape: f32[2,8,128], index: 2, kind: output, shape index: {}]
  %s3 = sld [smem:[#allocation0]]
  $region87: #{ud_forward.1} parent=0
    _
  %s5 = ssub.s32 1, %s3
  %s6 = scalar_select 0, %s5, %s3
  $region1: #{ud_forward.1} parent=0
    #allocation3 [shape = 'u8[245760]{0}', space=vmem, size = 0x3c000, scoped, tag = 'input window, operand 0']
    loop: start=0, step=1, limit=4
    $region2: #{ud_forward.1} parent=1 // loop_pre_header
      _
    $region3: #{ud_forward.1} parent=1 // loop_header
      %s8 = sphi 0, %s12
      %p9 = scmp.ge.s32.totalorder %s8, 4
      %s15 = sphi 0, %s27
      %s16 = sphi 0, %s23
      %s17 = sphi 0, %s15
      %s18 = sphi 0, %s16
      %s19 = sphi 0, %s17
      %s20 = sphi 0, %s18
      %s32 = sphi 0, %s34
      %s35 = sphi 0, %s32
      %s36 = sphi 0, %s35
      %s52 = sphi 0, %s36
      %s60 = sphi 0, %s62
      %s63 = sphi 0, %s60
      %s64 = sphi 0, %s63
      %s80 = sphi 0, %s64
      %s86 = sphi 0, %s88
      %s89 = sphi 0, %s86
      %s90 = sphi 0, %s89
      %s106 = sphi 0, %s90
    $region4: #{ud_forward.1} parent=1 // loop_header_branch
      %11 = sbr.rel (%p9) target = $region8
    $region5: #{ud_forward.1} parent=1 // loop_body
      %s13 = ssub.s32 %s8, 1
      %s14 = ssub.s32 %s8, 2
      %s21 = sadd.s32 1, %s16
      %p22 = scmp.ge.s32.totalorder %s21, 1
      %s23 = scalar_select %p22, 0, %s21
      %s24 = sadd.s32 1, %s15
      %s25 = scalar_select %p22, %s24, %s15
      %p26 = scmp.ge.s32.totalorder %s25, 2
      %s27 = scalar_select %p26, 0, %s25
      %s28 = sadd.s32 %s15, %s16
      %s29 = sadd.s32 %s27, %s23
      %s30 = ssub.s32 %s28, %s29
      %p31 = scmp.eq.s32.totalorder %s30, 0
      %s33 = sadd.s32 %s32, 1
      %s34 = scalar_select %p31, %s32, %s33
      %p37 = pneg %p31
      %p38 = scmp.eq.s32.totalorder %s8, 1
      %p39 = por %p37, %p38
      %p40 = scmp.ne.s32.totalorder %s32, %s35
      %p41 = scmp.eq.s32.totalorder %s8, 0
      %p42 = por %p40, %p41
      %p43 = scmp.ne.s32.totalorder %s32, %s35
      %p44 = scmp.eq.s32.totalorder %s13, 1
      %p45 = por %p43, %p44
      %p46 = scmp.ne.s32.totalorder %s35, %s36
      %p47 = scmp.eq.s32.totalorder %s13, 0
      %p48 = por %p46, %p47
      %p49 = scmp.ne.s32.totalorder %s35, %s36
      %p50 = scmp.eq.s32.totalorder %s14, 1
      %p51 = por %p49, %p50
      %p53 = scmp.ne.s32.totalorder %s36, %s52
      %p54 = scmp.eq.s32.totalorder %s14, 0
      %p55 = por %p53, %p54
      %s56 = sadd.s32 %s15, %s16
      %s57 = sadd.s32 %s27, %s23
      %s58 = ssub.s32 %s56, %s57
      %p59 = scmp.eq.s32.totalorder %s58, 0
      %s61 = sadd.s32 %s60, 1
      %s62 = scalar_select %p59, %s60, %s61
      %p65 = pneg %p59
      %p66 = scmp.eq.s32.totalorder %s8, 1
      %p67 = por %p65, %p66
      %p68 = scmp.ne.s32.totalorder %s60, %s63
      %p69 = scmp.eq.s32.totalorder %s8, 0
      %p70 = por %p68, %p69
      %p71 = scmp.ne.s32.totalorder %s60, %s63
      %p72 = scmp.eq.s32.totalorder %s13, 1
      %p73 = por %p71, %p72
      %p74 = scmp.ne.s32.totalorder %s63, %s64
      %p75 = scmp.eq.s32.totalorder %s13, 0
      %p76 = por %p74, %p75
      %p77 = scmp.ne.s32.totalorder %s63, %s64
      %p78 = scmp.eq.s32.totalorder %s14, 1
      %p79 = por %p77, %p78
      %p81 = scmp.ne.s32.totalorder %s64, %s80
      %p82 = scmp.eq.s32.totalorder %s14, 0
      %p83 = por %p81, %p82
      %s84 = ssub.s32 %s15, %s27
      %p85 = scmp.eq.s32.totalorder %s84, 0
      %s87 = sadd.s32 %s86, 1
      %s88 = scalar_select %p85, %s86, %s87
      %p91 = pneg %p85
      %p92 = scmp.eq.s32.totalorder %s8, 1
      %p93 = por %p91, %p92
      %p94 = scmp.ne.s32.totalorder %s86, %s89
      %p95 = scmp.eq.s32.totalorder %s8, 0
      %p96 = por %p94, %p95
      %p97 = scmp.ne.s32.totalorder %s86, %s89
      %p98 = scmp.eq.s32.totalorder %s13, 1
      %p99 = por %p97, %p98
      %p100 = scmp.ne.s32.totalorder %s89, %s90
      %p101 = scmp.eq.s32.totalorder %s13, 0
      %p102 = por %p100, %p101
      %p103 = scmp.ne.s32.totalorder %s89, %s90
      %p104 = scmp.eq.s32.totalorder %s14, 1
      %p105 = por %p103, %p104
      %p107 = scmp.ne.s32.totalorder %s90, %s106
      %p108 = scmp.eq.s32.totalorder %s14, 0
      %p109 = por %p107, %p108
      %p110 = scmp.le.s32.totalorder 1, %s8
      %p111 = scmp.lt.s32.totalorder %s8, 3
      %p112 = pnand %p110, %p111
      %p113 = pneg %p112
      // Predicated region
      $region9: #{ud_forward.1} parent=5 // pred_check
        _
      $region10: #{ud_forward.1} parent=5 // pred_check_branch
        %115 = sbr.rel (%p112) target = $region12
      $region11: #{ud_forward.1} parent=5 // pred_region
        %s116 = ssub.s32 %s8, 1
      $region12: #{ud_forward.1} parent=5 // pred_fallthru
        _
      %p117 = scmp.lt.s32.totalorder %s8, 2
      // Predicated region
      $region13: #{ud_forward.1} parent=5 // pred_check
        %p118 = pneg %p117
      $region14: #{ud_forward.1} parent=5 // pred_check_branch
        %120 = sbr.rel (%p118) target = $region16
      $region15: #{ud_forward.1} parent=5 // pred_region
        // Predicated region
        $region17: #{ud_forward.1} parent=15 // pred_check
          %p121 = pneg %p42
        $region18: #{ud_forward.1} parent=15 // pred_check_branch
          %123 = sbr.rel (%p121) target = $region20
        $region19: #{ud_forward.1} parent=15 // pred_region
          %s124 = sand.u32 %s32, 1
          %s125 = sand.u32 %s32, 1
          %s126 = smul.addr %s125, 240
          %s127 = scalar_lea.vmem [#allocation3], %s126
          %s128 = sadd.s32 %s15, %s16
          %s129 = smul.u32 5, %s128
          %s130 = smul.addr %s129, 8
          %s131 = scalar_lea.vmem %s0, %s130
          // Predicated region
          $region21: #{ud_forward.1} parent=19 // pred_check
            _
          $region22: #{ud_forward.1} parent=19 // pred_check_branch
            %133 = sbr.rel (0) target = $region24
          $region23: #{ud_forward.1} parent=19 // pred_region
            // Predicated region
            $region25: #{ud_forward.1} parent=23 // pred_check
              _
            $region26: #{ud_forward.1} parent=23 // pred_check_branch
              %135 = sbr.rel (0) target = $region28
            $region27: #{ud_forward.1} parent=23 // pred_region
              // Predicated region
              $region40: #{ud_forward.1} parent=27 // pred_check
                _
              $region41: #{ud_forward.1} parent=27 // pred_check_branch
                %208 = sbr.rel (0) target = $region43
              $region42: #{ud_forward.1} parent=27 // pred_region
                loop: start=0, step=1, limit=1
                $region44: #{ud_forward.1} parent=42 // loop_pre_header
                  _
                $region45: #{ud_forward.1} parent=42 // loop_header
                  %s210 = sphi 0, %s214
                  %p211 = scmp.ge.s32.totalorder %s210, 1
                  %s215 = sphi %s131, %s131
                  %s216 = sphi %s127, %s127
                $region46: #{ud_forward.1} parent=42 // loop_header_branch
                  %213 = sbr.rel (%p211) target = $region50
                $region47: #{ud_forward.1} parent=42 // loop_body
                  %v217 = vld [vmem:[%s215] sm:$0xff]
                  %218 = vst [vmem:[%s216] sm:$0xff] %v217
                  %v219 = vld [vmem:[%s215 + $0x8] sm:$0xff]
                  %220 = vst [vmem:[%s216 + $0x8] sm:$0xff] %v219
                  %v221 = vld [vmem:[%s215 + $0x10] sm:$0xff]
                  %222 = vst [vmem:[%s216 + $0x10] sm:$0xff] %v221
                  %v223 = vld [vmem:[%s215 + $0x18] sm:$0xff]
                  %224 = vst [vmem:[%s216 + $0x18] sm:$0xff] %v223
                  %v225 = vld [vmem:[%s215 + $0x20] sm:$0xff]
                  %226 = vst [vmem:[%s216 + $0x20] sm:$0xff] %v225
                  %v227 = vld [vmem:[%s215 + $0x50] sm:$0xff]
                  %228 = vst [vmem:[%s216 + $0x28] sm:$0xff] %v227
                  %v229 = vld [vmem:[%s215 + $0x58] sm:$0xff]
                  %230 = vst [vmem:[%s216 + $0x30] sm:$0xff] %v229
                  %v231 = vld [vmem:[%s215 + $0x60] sm:$0xff]
                  %232 = vst [vmem:[%s216 + $0x38] sm:$0xff] %v231
                  %v233 = vld [vmem:[%s215 + $0x68] sm:$0xff]
                  %234 = vst [vmem:[%s216 + $0x40] sm:$0xff] %v233
                  %v235 = vld [vmem:[%s215 + $0x70] sm:$0xff]
                  %236 = vst [vmem:[%s216 + $0x48] sm:$0xff] %v235
                  %v237 = vld [vmem:[%s215 + $0xa0] sm:$0xff]
                  %238 = vst [vmem:[%s216 + $0x50] sm:$0xff] %v237
                  %v239 = vld [vmem:[%s215 + $0xa8] sm:$0xff]
                  %240 = vst [vmem:[%s216 + $0x58] sm:$0xff] %v239
                  %v241 = vld [vmem:[%s215 + $0xb0] sm:$0xff]
                  %242 = vst [vmem:[%s216 + $0x60] sm:$0xff] %v241
                  %v243 = vld [vmem:[%s215 + $0xb8] sm:$0xff]
                  %244 = vst [vmem:[%s216 + $0x68] sm:$0xff] %v243
                  %v245 = vld [vmem:[%s215 + $0xc0] sm:$0xff]
                  %246 = vst [vmem:[%s216 + $0x70] sm:$0xff] %v245
                  %v247 = vld [vmem:[%s215 + $0xf0] sm:$0xff]
                  %248 = vst [vmem:[%s216 + $0x78] sm:$0xff] %v247
                  %v249 = vld [vmem:[%s215 + $0xf8] sm:$0xff]
                  %250 = vst [vmem:[%s216 + $0x80] sm:$0xff] %v249
                  %v251 = vld [vmem:[%s215 + $0x100] sm:$0xff]
                  %252 = vst [vmem:[%s216 + $0x88] sm:$0xff] %v251
                  %v253 = vld [vmem:[%s215 + $0x108] sm:$0xff]
                  %254 = vst [vmem:[%s216 + $0x90] sm:$0xff] %v253
                  %v255 = vld [vmem:[%s215 + $0x110] sm:$0xff]
                  %256 = vst [vmem:[%s216 + $0x98] sm:$0xff] %v255
                  %v257 = vld [vmem:[%s215 + $0x140] sm:$0xff]
                  %258 = vst [vmem:[%s216 + $0xa0] sm:$0xff] %v257
                  %v259 = vld [vmem:[%s215 + $0x148] sm:$0xff]
                  %260 = vst [vmem:[%s216 + $0xa8] sm:$0xff] %v259
                  %v261 = vld [vmem:[%s215 + $0x150] sm:$0xff]
                  %262 = vst [vmem:[%s216 + $0xb0] sm:$0xff] %v261
                  %v263 = vld [vmem:[%s215 + $0x158] sm:$0xff]
                  %264 = vst [vmem:[%s216 + $0xb8] sm:$0xff] %v263
                  %v265 = vld [vmem:[%s215 + $0x160] sm:$0xff]
                  %266 = vst [vmem:[%s216 + $0xc0] sm:$0xff] %v265
                  %v267 = vld [vmem:[%s215 + $0x190] sm:$0xff]
                  %268 = vst [vmem:[%s216 + $0xc8] sm:$0xff] %v267
                  %v269 = vld [vmem:[%s215 + $0x198] sm:$0xff]
                  %270 = vst [vmem:[%s216 + $0xd0] sm:$0xff] %v269
                  %v271 = vld [vmem:[%s215 + $0x1a0] sm:$0xff]
                  %272 = vst [vmem:[%s216 + $0xd8] sm:$0xff] %v271
                  %v273 = vld [vmem:[%s215 + $0x1a8] sm:$0xff]
                  %274 = vst [vmem:[%s216 + $0xe0] sm:$0xff] %v273
                  %v275 = vld [vmem:[%s215 + $0x1b0] sm:$0xff]
                  %276 = vst [vmem:[%s216 + $0xe8] sm:$0xff] %v275
                $region48: #{ud_forward.1} parent=42 // loop_footer
                  %s214 = sadd.s32 1, %s210
                $region49: #{ud_forward.1} parent=42 // loop_footer_branch
                  %209 = sbr.rel target = $region45
                $region50: #{ud_forward.1} parent=42 // loop_exit
                  _
              $region43: #{ud_forward.1} parent=27 // pred_fallthru
                _
              // Predicated region
              $region51: #{ud_forward.1} parent=27 // pred_check
                _
              $region52: #{ud_forward.1} parent=27 // pred_check_branch
                %278 = sbr.rel target = $region54
              $region53: #{ud_forward.1} parent=27 // pred_region
                _
              $region54: #{ud_forward.1} parent=27 // pred_fallthru
                _
            $region28: #{ud_forward.1} parent=23 // pred_fallthru
              _
            // Predicated region
            $region29: #{ud_forward.1} parent=23 // pred_check
              _
            $region30: #{ud_forward.1} parent=23 // pred_check_branch
              %137 = sbr.rel target = $region32
            $region31: #{ud_forward.1} parent=23 // pred_region
              loop: start=0, step=1, limit=1
              $region33: #{ud_forward.1} parent=31 // loop_pre_header
                _
              $region34: #{ud_forward.1} parent=31 // loop_header
                %s140 = sphi 0, %s144
                %p141 = scmp.ge.s32.totalorder %s140, 1
                %s145 = sphi %s131, %s131
                %s146 = sphi %s127, %s127
              $region35: #{ud_forward.1} parent=31 // loop_header_branch
                %143 = sbr.rel (%p141) target = $region39
              $region36: #{ud_forward.1} parent=31 // loop_body
                %v147 = vld [vmem:[%s145] sm:$0xff]
                %148 = vst [vmem:[%s146] sm:$0xff] %v147
                %v149 = vld [vmem:[%s145 + $0x8] sm:$0xff]
                %150 = vst [vmem:[%s146 + $0x8] sm:$0xff] %v149
                %v151 = vld [vmem:[%s145 + $0x10] sm:$0xff]
                %152 = vst [vmem:[%s146 + $0x10] sm:$0xff] %v151
                %v153 = vld [vmem:[%s145 + $0x18] sm:$0xff]
                %154 = vst [vmem:[%s146 + $0x18] sm:$0xff] %v153
                %v155 = vld [vmem:[%s145 + $0x20] sm:$0xff]
                %156 = vst [vmem:[%s146 + $0x20] sm:$0xff] %v155
                %v157 = vld [vmem:[%s145 + $0x50] sm:$0xff]
                %158 = vst [vmem:[%s146 + $0x28] sm:$0xff] %v157
                %v159 = vld [vmem:[%s145 + $0x58] sm:$0xff]
                %160 = vst [vmem:[%s146 + $0x30] sm:$0xff] %v159
                %v161 = vld [vmem:[%s145 + $0x60] sm:$0xff]
                %162 = vst [vmem:[%s146 + $0x38] sm:$0xff] %v161
                %v163 = vld [vmem:[%s145 + $0x68] sm:$0xff]
                %164 = vst [vmem:[%s146 + $0x40] sm:$0xff] %v163
                %v165 = vld [vmem:[%s145 + $0x70] sm:$0xff]
                %166 = vst [vmem:[%s146 + $0x48] sm:$0xff] %v165
                %v167 = vld [vmem:[%s145 + $0xa0] sm:$0xff]
                %168 = vst [vmem:[%s146 + $0x50] sm:$0xff] %v167
                %v169 = vld [vmem:[%s145 + $0xa8] sm:$0xff]
                %170 = vst [vmem:[%s146 + $0x58] sm:$0xff] %v169
                %v171 = vld [vmem:[%s145 + $0xb0] sm:$0xff]
                %172 = vst [vmem:[%s146 + $0x60] sm:$0xff] %v171
                %v173 = vld [vmem:[%s145 + $0xb8] sm:$0xff]
                %174 = vst [vmem:[%s146 + $0x68] sm:$0xff] %v173
                %v175 = vld [vmem:[%s145 + $0xc0] sm:$0xff]
                %176 = vst [vmem:[%s146 + $0x70] sm:$0xff] %v175
                %v177 = vld [vmem:[%s145 + $0xf0] sm:$0xff]
                %178 = vst [vmem:[%s146 + $0x78] sm:$0xff] %v177
                %v179 = vld [vmem:[%s145 + $0xf8] sm:$0xff]
                %180 = vst [vmem:[%s146 + $0x80] sm:$0xff] %v179
                %v181 = vld [vmem:[%s145 + $0x100] sm:$0xff]
                %182 = vst [vmem:[%s146 + $0x88] sm:$0xff] %v181
                %v183 = vld [vmem:[%s145 + $0x108] sm:$0xff]
                %184 = vst [vmem:[%s146 + $0x90] sm:$0xff] %v183
                %v185 = vld [vmem:[%s145 + $0x110] sm:$0xff]
                %186 = vst [vmem:[%s146 + $0x98] sm:$0xff] %v185
                %v187 = vld [vmem:[%s145 + $0x140] sm:$0xff]
                %188 = vst [vmem:[%s146 + $0xa0] sm:$0xff] %v187
                %v189 = vld [vmem:[%s145 + $0x148] sm:$0xff]
                %190 = vst [vmem:[%s146 + $0xa8] sm:$0xff] %v189
                %v191 = vld [vmem:[%s145 + $0x150] sm:$0xff]
                %192 = vst [vmem:[%s146 + $0xb0] sm:$0xff] %v191
                %v193 = vld [vmem:[%s145 + $0x158] sm:$0xff]
                %194 = vst [vmem:[%s146 + $0xb8] sm:$0xff] %v193
                %v195 = vld [vmem:[%s145 + $0x160] sm:$0xff]
                %196 = vst [vmem:[%s146 + $0xc0] sm:$0xff] %v195
                %v197 = vld [vmem:[%s145 + $0x190] sm:$0xff]
                %198 = vst [vmem:[%s146 + $0xc8] sm:$0xff] %v197
                %v199 = vld [vmem:[%s145 + $0x198] sm:$0xff]
                %200 = vst [vmem:[%s146 + $0xd0] sm:$0xff] %v199
                %v201 = vld [vmem:[%s145 + $0x1a0] sm:$0xff]
                %202 = vst [vmem:[%s146 + $0xd8] sm:$0xff] %v201
                %v203 = vld [vmem:[%s145 + $0x1a8] sm:$0xff]
                %204 = vst [vmem:[%s146 + $0xe0] sm:$0xff] %v203
                %v205 = vld [vmem:[%s145 + $0x1b0] sm:$0xff]
                %206 = vst [vmem:[%s146 + $0xe8] sm:$0xff] %v205
              $region37: #{ud_forward.1} parent=31 // loop_footer
                %s144 = sadd.s32 1, %s140
              $region38: #{ud_forward.1} parent=31 // loop_footer_branch
                %139 = sbr.rel target = $region34
              $region39: #{ud_forward.1} parent=31 // loop_exit
                _
            $region32: #{ud_forward.1} parent=23 // pred_fallthru
              _
          $region24: #{ud_forward.1} parent=19 // pred_fallthru
            _
          %279 = vnop
        $region20: #{ud_forward.1} parent=15 // pred_fallthru
          _
        // Predicated region
        $region55: #{ud_forward.1} parent=15 // pred_check
          %p280 = pneg %p70
        $region56: #{ud_forward.1} parent=15 // pred_check_branch
          %282 = sbr.rel (%p280) target = $region58
        $region57: #{ud_forward.1} parent=15 // pred_region
          %s283 = sadd.s32 %s15, %s16
          %s284 = smul.u32 5, %s283
          %p285 = scmp.lt.s32.totalorder %s284, 9
          %s286 = scalar_select %p285, %s284, 9
          %s287 = smul.addr %s286, 8
          %s288 = scalar_lea.vmem %s1, %s287
          %s289 = sadd.s32 %s15, %s16
          %s290 = smul.u32 5, %s289
        $region58: #{ud_forward.1} parent=15 // pred_fallthru
          _
      $region16: #{ud_forward.1} parent=5 // pred_fallthru
        _
      %p291 = scmp.le.s32.totalorder 1, %s8
      %p292 = scmp.lt.s32.totalorder %s8, 3
      %p293 = pnand %p291, %p292
      %p294 = pneg %p293
      // Predicated region
      $region59: #{ud_forward.1} parent=5 // pred_check
        _
      $region60: #{ud_forward.1} parent=5 // pred_check_branch
        %296 = sbr.rel (%p293) target = $region62
      $region61: #{ud_forward.1} parent=5 // pred_region
        %s297 = ssub.s32 %s8, 1
        %s298 = sand.u32 %s35, 1
        %s299 = sand.u32 %s35, 1
        %s300 = smul.addr %s299, 240
        %s301 = scalar_lea.vmem [#allocation3], %s300
        // Predicated region
        $region63: #{ud_forward.1} parent=61 // pred_check
          %p302 = pneg %p48
        $region64: #{ud_forward.1} parent=61 // pred_check_branch
          %304 = sbr.rel (%p302) target = $region66
        $region65: #{ud_forward.1} parent=61 // pred_region
          _
        $region66: #{ud_forward.1} parent=61 // pred_fallthru
          _
        %s305 = sand.u32 %s35, 1
        %s306 = sand.u32 %s35, 1
        %s307 = smul.addr %s306, 240
        %s308 = scalar_lea.vmem [#allocation3], %s307
        %p309 = pneg %p48
        %p310 = pneg %p45
        %s311 = sadd.s32 %s17, %s18
        %s312 = smul.u32 5, %s311
        %p313 = scmp.lt.s32.totalorder %s312, 9
        %s314 = scalar_select %p313, %s312, 9
        %s315 = smul.addr %s314, 8
        %s316 = scalar_lea.vmem %s1, %s315
        %p317 = pneg %p76
        %p318 = pneg %p73
        %p319 = pneg %p102
        %p320 = pneg %p99
        %p321 = scmp.lt.s32.totalorder %s17, 1
        %s322 = scalar_select %p321, %s17, 1
        %s323 = smul.addr %s322, 8
        %s324 = scalar_lea.vmem %s2, %s323
        %s325 = sadd.s32 %s17, %s18
        %s326 = smul.u32 5, %s325
        %s327 = sadd.s32 %s17, %s18
        %s328 = smul.u32 5, %s327
        %p329 = scmp.lt.s32.totalorder %s328, 9
        %s330 = scalar_select %p329, %s328, 9
        %s331 = smul.addr %s330, 8
        %s332 = scalar_lea.vmem %s1, %s331
        %s333 = sadd.s32 %s17, %s18
        %s334 = smul.u32 5, %s333
        %p335 = scmp.lt.s32.totalorder %s17, 1
        %s336 = scalar_select %p335, %s17, 1
        %s337 = smul.addr %s336, 8
        %s338 = scalar_lea.vmem %s2, %s337
        %p339 = scmp.eq.s32.totalorder %s18, 0
        // Predicated region
        $region67: #{ud_forward.1} parent=61 // pred_check
          %p340 = pneg %p339
        $region68: #{ud_forward.1} parent=61 // pred_check_branch
          %342 = sbr.rel (%p340) target = $region70
        $region69: #{ud_forward.1} parent=61 // pred_region
          %vm343 = vcmask 7168
          %344 = vst.msk [vmem:[#allocation2] sm:$0xff] %vm343, 0.0
          %345 = vst.msk [vmem:[#allocation2 + $0x8] sm:$0xff] %vm343, 0.0
          %346 = vst.msk [vmem:[#allocation2 + $0x10] sm:$0xff] %vm343, 0.0
          %347 = vst.msk [vmem:[#allocation2 + $0x18] sm:$0xff] %vm343, 0.0
          %348 = vst.msk [vmem:[#allocation2 + $0x20] sm:$0xff] %vm343, 0.0
        $region70: #{ud_forward.1} parent=61 // pred_fallthru
          _
        %v349 = vld [vmem:[%s301] sm:$0xff]
        %v350 = vld [vmem:[%s301 + $0x8] sm:$0xff]
        %v351 = vld [vmem:[%s301 + $0x10] sm:$0xff]
        %v352 = vld [vmem:[%s301 + $0x18] sm:$0xff]
        %v353 = vld [vmem:[%s301 + $0x20] sm:$0xff]
        %s354 = scalar_lea.vmem %s301, 40 [#allocation3]
        %v355 = vld [vmem:[%s354] sm:$0xff]
        %v356 = vld [vmem:[%s354 + $0x8] sm:$0xff]
        %v357 = vld [vmem:[%s354 + $0x10] sm:$0xff]
        %v358 = vld [vmem:[%s354 + $0x18] sm:$0xff]
        %v359 = vld [vmem:[%s354 + $0x20] sm:$0xff]
        %s360 = scalar_lea.vmem %s301, 80 [#allocation3]
        %v361 = vld [vmem:[%s360] sm:$0xff]
        %v362 = vld [vmem:[%s360 + $0x8] sm:$0xff]
        %v363 = vld [vmem:[%s360 + $0x10] sm:$0xff]
        %v364 = vld [vmem:[%s360 + $0x18] sm:$0xff]
        %v365 = vld [vmem:[%s360 + $0x20] sm:$0xff]
        %s366 = scalar_lea.vmem %s301, 120 [#allocation3]
        %v367 = vld [vmem:[%s366] sm:$0xff]
        %v368 = vld [vmem:[%s366 + $0x8] sm:$0xff]
        %v369 = vld [vmem:[%s366 + $0x10] sm:$0xff]
        %v370 = vld [vmem:[%s366 + $0x18] sm:$0xff]
        %v371 = vld [vmem:[%s366 + $0x20] sm:$0xff]
        %s372 = scalar_lea.vmem %s301, 160 [#allocation3]
        %v373 = vld [vmem:[%s372] sm:$0xff]
        %v374 = vld [vmem:[%s372 + $0x8] sm:$0xff]
        %v375 = vld [vmem:[%s372 + $0x10] sm:$0xff]
        %v376 = vld [vmem:[%s372 + $0x18] sm:$0xff]
        %v377 = vld [vmem:[%s372 + $0x20] sm:$0xff]
        %s378 = scalar_lea.vmem %s301, 200 [#allocation3]
        %v379 = vld [vmem:[%s378] sm:$0xff]
        %v380 = vld [vmem:[%s378 + $0x8] sm:$0xff]
        %v381 = vld [vmem:[%s378 + $0x10] sm:$0xff]
        %v382 = vld [vmem:[%s378 + $0x18] sm:$0xff]
        %v383 = vld [vmem:[%s378 + $0x20] sm:$0xff]
        %v384 = vld [vmem:[%s332] sm:$0xff]
        %v385 = vld [vmem:[%s332 + $0x8] sm:$0xff]
        %v386 = vld [vmem:[%s332 + $0x10] sm:$0xff]
        %v387 = vld [vmem:[%s332 + $0x18] sm:$0xff]
        %v388 = vld [vmem:[%s332 + $0x20] sm:$0xff]
        %v389 = vmul.f32 %v349, %v355
        %v390 = vmul.f32 %v350, %v356
        %v391 = vmul.f32 %v351, %v357
        %v392 = vmul.f32 %v352, %v358
        %v393 = vmul.f32 %v353, %v359
        %394 = vadd.xlane.f32.xlu0 %v389
        %v395 = vpop.xlane.xlu0 %394
        %396 = vadd.xlane.f32.xlu0 %v390
        %v397 = vpop.xlane.xlu0 %396
        %398 = vadd.xlane.f32.xlu0 %v391
        %v399 = vpop.xlane.xlu0 %398
        %400 = vadd.xlane.f32.xlu0 %v392
        %v401 = vpop.xlane.xlu0 %400
        %402 = vadd.xlane.f32.xlu0 %v393
        %v403 = vpop.xlane.xlu0 %402
        %v404 = vmul.f32 %v395, %v379
        %v405 = vmul.f32 %v397, %v380
        %v406 = vmul.f32 %v399, %v381
        %v407 = vmul.f32 %v401, %v382
        %v408 = vmul.f32 %v403, %v383
        %v409 = vadd.f32 %v349, %v404
        %v410 = vadd.f32 %v350, %v405
        %v411 = vadd.f32 %v351, %v406
        %v412 = vadd.f32 %v352, %v407
        %v413 = vadd.f32 %v353, %v408
        %v414 = vmul.f32 %v361, %v367
        %v415 = vmul.f32 %v362, %v368
        %v416 = vmul.f32 %v363, %v369
        %v417 = vmul.f32 %v364, %v370
        %v418 = vmul.f32 %v365, %v371
        %419 = vadd.xlane.f32.xlu0 %v414
        %v420 = vpop.xlane.xlu0 %419
        %421 = vadd.xlane.f32.xlu0 %v415
        %v422 = vpop.xlane.xlu0 %421
        %423 = vadd.xlane.f32.xlu0 %v416
        %v424 = vpop.xlane.xlu0 %423
        %425 = vadd.xlane.f32.xlu0 %v417
        %v426 = vpop.xlane.xlu0 %425
        %427 = vadd.xlane.f32.xlu0 %v418
        %v428 = vpop.xlane.xlu0 %427
        %v429 = vmul.f32 %v420, %v379
        %v430 = vmul.f32 %v422, %v380
        %v431 = vmul.f32 %v424, %v381
        %v432 = vmul.f32 %v426, %v382
        %v433 = vmul.f32 %v428, %v383
        %v434 = vadd.f32 %v361, %v429
        %v435 = vadd.f32 %v362, %v430
        %v436 = vadd.f32 %v363, %v431
        %v437 = vadd.f32 %v364, %v432
        %v438 = vadd.f32 %v365, %v433
        %v439 = vmul.f32 %v409, %v434
        %v440 = vmul.f32 %v410, %v435
        %v441 = vmul.f32 %v411, %v436
        %v442 = vmul.f32 %v412, %v437
        %v443 = vmul.f32 %v413, %v438
        %v444 = vmul.f32 %v439, %v373
        %v445 = vmul.f32 %v440, %v374
        %v446 = vmul.f32 %v441, %v375
        %v447 = vmul.f32 %v442, %v376
        %v448 = vmul.f32 %v443, %v377
        %449 = vadd.xlane.f32.xlu0 %v444
        %v450 = vpop.xlane.xlu0 %449
        %451 = vadd.xlane.f32.xlu0 %v445
        %v452 = vpop.xlane.xlu0 %451
        %453 = vadd.xlane.f32.xlu0 %v446
        %v454 = vpop.xlane.xlu0 %453
        %455 = vadd.xlane.f32.xlu0 %v447
        %v456 = vpop.xlane.xlu0 %455
        %457 = vadd.xlane.f32.xlu0 %v448
        %v458 = vpop.xlane.xlu0 %457
        %v459 = vmul.f32 %v384, %v450
        %v460 = vmul.f32 %v385, %v452
        %v461 = vmul.f32 %v386, %v454
        %v462 = vmul.f32 %v387, %v456
        %v463 = vmul.f32 %v388, %v458
        %469 = vrot.lane.b32.xlu0 %v384, 127
        %v470 = vpop.permute.xlu0 %469
        %471 = vrot.lane.b32.xlu0 %v385, 127
        %v472 = vpop.permute.xlu0 %471
        %473 = vrot.lane.b32.xlu0 %v386, 127
        %v474 = vpop.permute.xlu0 %473
        %475 = vrot.lane.b32.xlu0 %v387, 127
        %v476 = vpop.permute.xlu0 %475
        %477 = vrot.lane.b32.xlu0 %v388, 127
        %v478 = vpop.permute.xlu0 %477
        %v484 = vadd.f32 %v459, %v470
        %v485 = vadd.f32 %v460, %v472
        %v486 = vadd.f32 %v461, %v474
        %v487 = vadd.f32 %v462, %v476
        %v488 = vadd.f32 %v463, %v478
        %489 = vrot.lane.b32.xlu0 %v384, 3
        %v490 = vpop.permute.xlu0 %489
        %491 = vrot.lane.b32.xlu0 %v385, 3
        %v492 = vpop.permute.xlu0 %491
        %493 = vrot.lane.b32.xlu0 %v386, 3
        %v494 = vpop.permute.xlu0 %493
        %495 = vrot.lane.b32.xlu0 %v387, 3
        %v496 = vpop.permute.xlu0 %495
        %497 = vrot.lane.b32.xlu0 %v388, 3
        %v498 = vpop.permute.xlu0 %497
        %v504 = vsub.f32 %v484, %v490
        %v505 = vsub.f32 %v485, %v492
        %v506 = vsub.f32 %v486, %v494
        %v507 = vsub.f32 %v487, %v496
        %v508 = vsub.f32 %v488, %v498
        %v509 = vmul.f32 %v409, %v409
        %v510 = vmul.f32 %v410, %v410
        %v511 = vmul.f32 %v411, %v411
        %v512 = vmul.f32 %v412, %v412
        %v513 = vmul.f32 %v413, %v413
        %v514 = vmul.f32 %v434, %v434
        %v515 = vmul.f32 %v435, %v435
        %v516 = vmul.f32 %v436, %v436
        %v517 = vmul.f32 %v437, %v437
        %v518 = vmul.f32 %v438, %v438
        %v519 = vadd.f32 %v509, %v514
        %v520 = vadd.f32 %v510, %v515
        %v521 = vadd.f32 %v511, %v516
        %v522 = vadd.f32 %v512, %v517
        %v523 = vadd.f32 %v513, %v518
        %v524 = vmul.f32 %v373, %v373
        %v525 = vmul.f32 %v374, %v374
        %v526 = vmul.f32 %v375, %v375
        %v527 = vmul.f32 %v376, %v376
        %v528 = vmul.f32 %v377, %v377
        %v529 = vadd.f32 %v519, %v524
        %v530 = vadd.f32 %v520, %v525
        %v531 = vadd.f32 %v521, %v526
        %v532 = vadd.f32 %v522, %v527
        %v533 = vadd.f32 %v523, %v528
        %534 = vadd.xlane.f32.xlu0 %v529
        %v535 = vpop.xlane.xlu0 %534
        %536 = vadd.xlane.f32.xlu0 %v530
        %v537 = vpop.xlane.xlu0 %536
        %538 = vadd.xlane.f32.xlu0 %v531
        %v539 = vpop.xlane.xlu0 %538
        %540 = vadd.xlane.f32.xlu0 %v532
        %v541 = vpop.xlane.xlu0 %540
        %542 = vadd.xlane.f32.xlu0 %v533
        %v543 = vpop.xlane.xlu0 %542
        %v544 = vld [vmem:[#allocation2] sm:$0xff]
        %v545 = vld [vmem:[#allocation2 + $0x8] sm:$0xff]
        %v546 = vld [vmem:[#allocation2 + $0x10] sm:$0xff]
        %v547 = vld [vmem:[#allocation2 + $0x18] sm:$0xff]
        %v548 = vld [vmem:[#allocation2 + $0x20] sm:$0xff]
        %554 = vrot.lane.b32.xlu0 %v504, 126
        %v555 = vpop.permute.xlu0 %554
        %556 = vrot.lane.b32.xlu0 %v505, 126
        %v557 = vpop.permute.xlu0 %556
        %558 = vrot.lane.b32.xlu0 %v506, 126
        %v559 = vpop.permute.xlu0 %558
        %560 = vrot.lane.b32.xlu0 %v507, 126
        %v561 = vpop.permute.xlu0 %560
        %562 = vrot.lane.b32.xlu0 %v508, 126
        %v563 = vpop.permute.xlu0 %562
        %v569 = vmul.f32 %v384, %v555
        %v570 = vmul.f32 %v385, %v557
        %v571 = vmul.f32 %v386, %v559
        %v572 = vmul.f32 %v387, %v561
        %v573 = vmul.f32 %v388, %v563
        %v574 = vmul.f32 %v569, %v555
        %v575 = vmul.f32 %v570, %v557
        %v576 = vmul.f32 %v571, %v559
        %v577 = vmul.f32 %v572, %v561
        %v578 = vmul.f32 %v573, %v563
        %v579 = vmul.f32 %v384, %v535
        %v580 = vmul.f32 %v385, %v537
        %v581 = vmul.f32 %v386, %v539
        %v582 = vmul.f32 %v387, %v541
        %v583 = vmul.f32 %v388, %v543
        %589 = vrot.lane.b32.xlu0 %v579, 127
        %v590 = vpop.permute.xlu0 %589
        %591 = vrot.lane.b32.xlu0 %v580, 127
        %v592 = vpop.permute.xlu0 %591
        %593 = vrot.lane.b32.xlu0 %v581, 127
        %v594 = vpop.permute.xlu0 %593
        %595 = vrot.lane.b32.xlu0 %v582, 127
        %v596 = vpop.permute.xlu0 %595
        %597 = vrot.lane.b32.xlu0 %v583, 127
        %v598 = vpop.permute.xlu0 %597
        %v604 = vadd.f32 %v574, %v590
        %v605 = vadd.f32 %v575, %v592
        %v606 = vadd.f32 %v576, %v594
        %v607 = vadd.f32 %v577, %v596
        %v608 = vadd.f32 %v578, %v598
        %614 = vrot.lane.b32.xlu0 %v604, 127
        %v615 = vpop.permute.xlu0 %614
        %616 = vrot.lane.b32.xlu0 %v605, 127
        %v617 = vpop.permute.xlu0 %616
        %618 = vrot.lane.b32.xlu0 %v606, 127
        %v619 = vpop.permute.xlu0 %618
        %620 = vrot.lane.b32.xlu0 %v607, 127
        %v621 = vpop.permute.xlu0 %620
        %622 = vrot.lane.b32.xlu0 %v608, 127
        %v623 = vpop.permute.xlu0 %622
        %v629 = vadd.f32 %v544, %v615
        %v630 = vadd.f32 %v545, %v617
        %v631 = vadd.f32 %v546, %v619
        %v632 = vadd.f32 %v547, %v621
        %v633 = vadd.f32 %v548, %v623
        %vm634 = vcmask 7168
        %635 = vst.msk [vmem:[#allocation2] sm:$0xff] %vm634, %v629
        %636 = vst.msk [vmem:[#allocation2 + $0x8] sm:$0xff] %vm634, %v630
        %637 = vst.msk [vmem:[#allocation2 + $0x10] sm:$0xff] %vm634, %v631
        %638 = vst.msk [vmem:[#allocation2 + $0x18] sm:$0xff] %vm634, %v632
        %639 = vst.msk [vmem:[#allocation2 + $0x20] sm:$0xff] %vm634, %v633
        // Predicated region
        $region71: #{ud_forward.1} parent=61 // pred_check
          %p640 = pneg %p339
        $region72: #{ud_forward.1} parent=61 // pred_check_branch
          %642 = sbr.rel (%p640) target = $region74
        $region73: #{ud_forward.1} parent=61 // pred_region
          %v643 = vld [vmem:[#allocation2] sm:$0xff]
          %v644 = vld [vmem:[#allocation2 + $0x8] sm:$0xff]
          %v645 = vld [vmem:[#allocation2 + $0x10] sm:$0xff]
          %v646 = vld [vmem:[#allocation2 + $0x18] sm:$0xff]
          %v647 = vld [vmem:[#allocation2 + $0x20] sm:$0xff]
          %v648 = vsel %vm634, %v643, 0.0
          %v649 = vsel %vm634, %v644, 0.0
          %v650 = vadd.f32 %v648, %v649
          %v651 = vsel %vm634, %v645, 0.0
          %v652 = vadd.f32 %v650, %v651
          %v653 = vsel %vm634, %v646, 0.0
          %v654 = vadd.f32 %v652, %v653
          %v655 = vsel %vm634, %v647, 0.0
          %v656 = vadd.f32 %v654, %v655
          %657 = vadd.xlane.f32.xlu0 %v656
          %v658 = vpop.xlane.xlu0 %657
          %v659 = vrot.slane %v658, 4
          %v660 = vadd.f32 %v658, %v659
          %v661 = vrot.slane %v660, 2
          %v662 = vadd.f32 %v660, %v661
          %v663 = vrot.slane %v662, 1
          %v664 = vadd.f32 %v662, %v663
          %s665 = vtos %v664
          %v666 = vstv %s665
          %667 = vst [vmem:[%s338] sm:$0xff] %v666
        $region74: #{ud_forward.1} parent=61 // pred_fallthru
          _
        %p668 = scmp.lt.s32.totalorder %s17, 1
        %s669 = scalar_select %p668, %s17, 1
        %s670 = smul.addr %s669, 8
        %s671 = scalar_lea.vmem %s2, %s670
        // Predicated region
        $region75: #{ud_forward.1} parent=61 // pred_check
          %p672 = pneg %p99
        $region76: #{ud_forward.1} parent=61 // pred_check_branch
          %674 = sbr.rel (%p672) target = $region78
        $region77: #{ud_forward.1} parent=61 // pred_region
          _
        $region78: #{ud_forward.1} parent=61 // pred_fallthru
          _
      $region62: #{ud_forward.1} parent=5 // pred_fallthru
        _
      %p675 = scmp.le.s32.totalorder 2, %s8
      // Predicated region
      $region79: #{ud_forward.1} parent=5 // pred_check
        %p676 = pneg %p675
      $region80: #{ud_forward.1} parent=5 // pred_check_branch
        %678 = sbr.rel (%p676) target = $region82
      $region81: #{ud_forward.1} parent=5 // pred_region
        %s679 = ssub.s32 %s8, 2
        // Predicated region
        $region83: #{ud_forward.1} parent=81 // pred_check
          %p680 = pneg %p105
        $region84: #{ud_forward.1} parent=81 // pred_check_branch
          %682 = sbr.rel (%p680) target = $region86
        $region85: #{ud_forward.1} parent=81 // pred_region
          %p683 = scmp.lt.s32.totalorder %s19, 1
          %s684 = scalar_select %p683, %s19, 1
          %s685 = smul.addr %s684, 8
          %s686 = scalar_lea.vmem %s2, %s685
        $region86: #{ud_forward.1} parent=81 // pred_fallthru
          _
      $region82: #{ud_forward.1} parent=5 // pred_fallthru
        _
    $region6: #{ud_forward.1} parent=1 // loop_footer
      %s12 = sadd.s32 1, %s8
    $region7: #{ud_forward.1} parent=1 // loop_footer_branch
      %7 = sbr.rel target = $region3
    $region8: #{ud_forward.1} parent=1 // loop_exit
      _

</llo_original>
